<compile_context>
chip_gen: v7x
topology: tpu7x:2x2x1
jax: 0.10.0
libtpu: 0.0.40
codegen_flags: <defaults>
</compile_context>

<pallas_src>
import functools

import jax
import jax.numpy as jnp
from jax.experimental import pallas as pl
from jax.experimental.pallas import tpu as pltpu


def _round_up(v, m):
    return ((v + m - 1) // m) * m


def _dense_kernel(x_ref, w_ref, b_ref, o_ref, acc_ref, *, activation):
    """One (tm, tn) output tile, accumulated over the K grid axis.

    x_ref:   (tm, tk)       input tile (compute dtype, e.g. bf16)
    w_ref:   (tk, tn)       pre-transposed weight tile, (Din, Dout) layout
    b_ref:   (1,  tn) f32   bias tile
    o_ref:   (tm, tn)       output tile
    acc_ref: (tm, tn) f32   VMEM accumulator scratch
    """
    k = pl.program_id(2)

    # Standard (tm,tk) @ (tk,tn) MXU matmul; RHS was transposed once at param
    # prep, so no per-tile relayout/vxpose work shares the extended slots.
    partial = jnp.dot(x_ref[...], w_ref[...], preferred_element_type=jnp.float32)

    @pl.when(k == 0)
    def _():
        acc_ref[...] = partial            # first K step: store directly

    @pl.when(k > 0)
    def _():
        acc_ref[...] += partial

    # Epilogue only on the last K step: bias add + activation + lane-dense store.
    @pl.when(k == pl.num_programs(2) - 1)
    def _():
        acc = acc_ref[...] + b_ref[...]   # (1, tn) broadcasts over rows
        if activation == "relu":
            acc = jnp.maximum(acc, 0.0)   # VPU
        elif activation == "sigmoid":
            acc = jax.nn.sigmoid(acc)     # EUP (off the MXU path)
        else:
            raise ValueError(f"unknown activation: {activation}")
        o_ref[...] = acc.astype(o_ref.dtype)


def _chip_config():
    """Chip-aware tile sizes / VMEM limit (bf16 operands, f32 accumulation)."""
    vmem_bytes = 128 * 1024 * 1024
    try:
        info = pltpu.get_tpu_info()
        vmem_bytes = int(getattr(info, "vmem_capacity_bytes", vmem_bytes))
    except Exception:
        pass
    if vmem_bytes <= 64 * 1024 * 1024:
        # v7x: 64 MiB VMEM/TC, ~3.2 TB/s HBM -> 1024x1024 tiles already MXU-bound.
        return dict(tm=1024, tn=1024, tk=1024, vmem_limit=52 * 1024 * 1024)
    # v5e / v6e: 128 MiB VMEM. 1024x2048 -> AI ~683 FLOP/byte (MXU-bound on v6e).
    return dict(tm=1024, tn=2048, tk=1024, vmem_limit=96 * 1024 * 1024)


def make_dense_layer(weight, bias, activation="relu", *,
                     compute_dtype=jnp.bfloat16, out_dtype=jnp.float32):
    """Build an apply(x) function equivalent to nn.Linear(in, out) + ReLU/Sigmoid.

    weight: (output_dim, input_dim)  PyTorch nn.Linear layout
    bias:   (output_dim,)
    Parameter padding / transpose / cast happens ONCE here (not per call).
    """
    assert activation in ("relu", "sigmoid")
    Dout, Din = weight.shape
    assert bias.shape == (Dout,)

    cfg = _chip_config()
    tm_max, tn, tk = cfg["tm"], cfg["tn"], cfg["tk"]

    # Clamp N/K tiles to the 128-aligned problem size.
    Np128 = _round_up(Dout, 128)
    Kp128 = _round_up(Din, 128)
    tn = min(tn, Np128)
    tk = min(tk, Kp128)
    # Keep >= 2 parallel output tiles when Dout allows, so both TensorCores
    # (v7x) / megacore halves get work even if the batch fits one M tile.
    if tn >= Np128 and Np128 >= 256:
        tn = _round_up(Np128 // 2, 128)

    Np = _round_up(Dout, tn)
    Kp = _round_up(Din, tk)

    # One-time parameter prep: pad, transpose to (Din, Dout), cast to MXU dtype.
    w_p = weight
    if (Np, Kp) != (Dout, Din):
        w_p = jnp.pad(weight, ((0, Np - Dout), (0, Kp - Din)))
    w_t = jnp.asarray(w_p.T, dtype=compute_dtype)                 # (Kp, Np)
    b_p = bias if Np == Dout else jnp.pad(bias, (0, Np - Dout))
    b2 = jnp.asarray(b_p.reshape(1, Np), dtype=jnp.float32)

    kernel = functools.partial(_dense_kernel, activation=activation)

    def apply(x):
        B, Din_x = x.shape
        assert Din_x == Din
        tm = min(tm_max, _round_up(B, 8))
        Mp = _round_up(B, tm)

        x_p = x
        if (Mp, Kp) != (B, Din):
            x_p = jnp.pad(x, ((0, Mp - B), (0, Kp - Din)))
        x_p = x_p.astype(compute_dtype)

        grid = (Mp // tm, Np // tn, Kp // tk)
        out_p = pl.pallas_call(
            kernel,
            out_shape=jax.ShapeDtypeStruct((Mp, Np), out_dtype),
            grid=grid,
            in_specs=[
                pl.BlockSpec((tm, tk), lambda i, j, k: (i, k)),   # x tile
                pl.BlockSpec((tk, tn), lambda i, j, k: (k, j)),   # weight (Din, Dout)
                pl.BlockSpec((1, tn), lambda i, j, k: (0, j)),    # bias tile
            ],
            out_specs=pl.BlockSpec((tm, tn), lambda i, j, k: (i, j)),
            scratch_shapes=[pltpu.VMEM((tm, tn), jnp.float32)],
            compiler_params=pltpu.CompilerParams(
                dimension_semantics=("parallel", "parallel", "arbitrary"),
                vmem_limit_bytes=cfg["vmem_limit"],
            ),
        )(x_p, w_t, b2)

        if (Mp, Np) != (B, Dout):
            out_p = out_p[:B, :Dout]
        return out_p

    return apply


def dense_layer(x, weight, bias, activation="relu", *, compute_dtype=jnp.bfloat16):
    """One-shot convenience wrapper (param prep + apply)."""
    return make_dense_layer(weight, bias, activation, compute_dtype=compute_dtype)(x)
    # TODO(synk): optionally emit bf16 output (out_dtype) on v7x to halve output
    # DMA / double-buffer VMEM when downstream tolerates it.


if __name__ == "__main__":
    # Small shapes consistent with DenseLayer(input_dim=32, output_dim=64)
    batch, input_dim, output_dim = 8, 32, 64

    key = jax.random.PRNGKey(0)
    kx, kw, kb, kx2, kw2, kb2 = jax.random.split(key, 6)

    x = jax.random.normal(kx, (batch, input_dim), dtype=jnp.float32)
    bound = 1.0 / (input_dim ** 0.5)
    weight = jax.random.uniform(kw, (output_dim, input_dim),
                                minval=-bound, maxval=bound, dtype=jnp.float32)
    bias = jax.random.uniform(kb, (output_dim,),
                              minval=-bound, maxval=bound, dtype=jnp.float32)

    ref_relu = jnp.maximum(x @ weight.T + bias, 0.0)
    ref_sig = jax.nn.sigmoid(x @ weight.T + bias)

    # f32 compute path: exact match vs reference.
    out_f32 = jax.block_until_ready(
        make_dense_layer(weight, bias, "relu", compute_dtype=jnp.float32)(x))
    assert out_f32.shape == (batch, output_dim)
    assert jnp.allclose(out_f32, ref_relu, atol=1e-5, rtol=1e-5)

    # bf16 operand path (default fast path, f32 accumulation): looser tolerance.
    out_relu = jax.block_until_ready(make_dense_layer(weight, bias, "relu")(x))
    assert out_relu.shape == (batch, output_dim)
    assert jnp.allclose(out_relu, ref_relu, atol=5e-2, rtol=5e-2)

    out_sig = jax.block_until_ready(make_dense_layer(weight, bias, "sigmoid")(x))
    assert out_sig.shape == (batch, output_dim)
    assert jnp.allclose(out_sig, ref_sig, atol=5e-2, rtol=5e-2)

    # Ragged shapes: exercises padding + a multi-tile (N) grid.
    b2_, din2, dout2 = 37, 200, 300
    x2 = jax.random.normal(kx2, (b2_, din2), dtype=jnp.float32)
    w2 = jax.random.normal(kw2, (dout2, din2), dtype=jnp.float32) * (din2 ** -0.5)
    bb2 = jax.random.normal(kb2, (dout2,), dtype=jnp.float32) * 0.1
    out2 = jax.block_until_ready(make_dense_layer(w2, bb2, "relu")(x2))
    ref2 = jnp.maximum(x2 @ w2.T + bb2, 0.0)
    assert out2.shape == (b2_, dout2)
    assert jnp.allclose(out2, ref2, atol=7e-2, rtol=7e-2)

    print("KERNEL_OK")
</pallas_src>

<mosaic_0001>
module attributes {stable_mosaic.version = 11 : i64} {
  func.func @_dense_kernel(%arg0: i32, %arg1: i32, %arg2: i32, %arg3: memref<8x128xf32, #tpu.memory_space<vmem>>, %arg4: memref<128x128xf32, #tpu.memory_space<vmem>>, %arg5: memref<1x128xf32, #tpu.memory_space<vmem>>, %arg6: memref<8x128xf32, #tpu.memory_space<vmem>>, %arg7: memref<8x128xf32, #tpu.memory_space<vmem>>) attributes {dimension_semantics = [#tpu.dimension_semantics<parallel>, #tpu.dimension_semantics<parallel>, #tpu.dimension_semantics<arbitrary>], iteration_bounds = array<i64: 1, 1, 1>, scalar_prefetch = 0 : i64, scratch_operands = 1 : i64, tpu.core_type = #tpu.core_type<tc>, window_params = [{transform_indices = @transform_0, window_bounds = array<i64: 8, 128>}, {transform_indices = @transform_1, window_bounds = array<i64: 128, 128>}, {transform_indices = @transform_2, window_bounds = array<i64: 1, 128>}, {transform_indices = @transform_3, window_bounds = array<i64: 8, 128>}]} {
    %c0 = arith.constant 0 : index
    %c0_0 = arith.constant 0 : index
    %0 = vector.load %arg3[%c0, %c0_0] : memref<8x128xf32, #tpu.memory_space<vmem>>, vector<8x128xf32>
    %c0_1 = arith.constant 0 : index
    %c0_2 = arith.constant 0 : index
    %1 = vector.load %arg4[%c0_1, %c0_2] : memref<128x128xf32, #tpu.memory_space<vmem>>, vector<128x128xf32>
    %cst = arith.constant dense<0.000000e+00> : vector<8x128xf32>
    %2 = tpu.matmul %0, %1, %cst {dimension_numbers = #tpu.dot_dimension_numbers<[1], [0], [0], [1], [0, 0, 1, 1], [], []>} : vector<8x128xf32>, vector<128x128xf32>, vector<8x128xf32> -> vector<8x128xf32>
    %c0_i32 = arith.constant 0 : i32
    %3 = arith.cmpi eq, %arg2, %c0_i32 : i32
    %4 = arith.extui %3 : i1 to i32
    %c0_i32_3 = arith.constant 0 : i32
    %5 = arith.cmpi ne, %4, %c0_i32_3 : i32
    scf.if %5 {
      %c0_8 = arith.constant 0 : index
      %c0_9 = arith.constant 0 : index
      %12 = vector.load %arg7[%c0_8, %c0_9] : memref<8x128xf32, #tpu.memory_space<vmem>>, vector<8x128xf32>
      tpu.vector_store %arg7[%c0_8, %c0_9], %2 {strides = array<i32>} : memref<8x128xf32, #tpu.memory_space<vmem>>, vector<8x128xf32>,
    } else {
    }
    %c0_i32_4 = arith.constant 0 : i32
    %6 = arith.cmpi sgt, %arg2, %c0_i32_4 : i32
    %7 = arith.extui %6 : i1 to i32
    %c0_i32_5 = arith.constant 0 : i32
    %8 = arith.cmpi ne, %7, %c0_i32_5 : i32
    scf.if %8 {
      %c0_8 = arith.constant 0 : index
      %c0_9 = arith.constant 0 : index
      %12 = vector.load %arg7[%c0_8, %c0_9] : memref<8x128xf32, #tpu.memory_space<vmem>>, vector<8x128xf32>
      %13 = arith.addf %12, %2 : vector<8x128xf32>
      %c0_10 = arith.constant 0 : index
      %c0_11 = arith.constant 0 : index
      %14 = vector.load %arg7[%c0_10, %c0_11] : memref<8x128xf32, #tpu.memory_space<vmem>>, vector<8x128xf32>
      tpu.vector_store %arg7[%c0_10, %c0_11], %13 {strides = array<i32>} : memref<8x128xf32, #tpu.memory_space<vmem>>, vector<8x128xf32>,
    } else {
    }
    %c0_i32_6 = arith.constant 0 : i32
    %9 = arith.cmpi eq, %arg2, %c0_i32_6 : i32
    %10 = arith.extui %9 : i1 to i32
    %c0_i32_7 = arith.constant 0 : i32
    %11 = arith.cmpi ne, %10, %c0_i32_7 : i32
    scf.if %11 {
      %c0_8 = arith.constant 0 : index
      %c0_9 = arith.constant 0 : index
      %12 = vector.load %arg7[%c0_8, %c0_9] : memref<8x128xf32, #tpu.memory_space<vmem>>, vector<8x128xf32>
      %c0_10 = arith.constant 0 : index
      %c0_11 = arith.constant 0 : index
      %13 = vector.load %arg5[%c0_10, %c0_11] : memref<1x128xf32, #tpu.memory_space<vmem>>, vector<1x128xf32>
      %14 = vector.broadcast %13 : vector<1x128xf32> to vector<8x128xf32>
      %15 = arith.addf %12, %14 : vector<8x128xf32>
      %cst_12 = arith.constant 0.000000e+00 : f32
      %16 = vector.broadcast %cst_12 : f32 to vector<8x128xf32>
      %17 = arith.maximumf %15, %16 : vector<8x128xf32>
      %c0_13 = arith.constant 0 : index
      %c0_14 = arith.constant 0 : index
      %18 = vector.load %arg6[%c0_13, %c0_14] : memref<8x128xf32, #tpu.memory_space<vmem>>, vector<8x128xf32>
      tpu.vector_store %arg6[%c0_13, %c0_14], %17 {strides = array<i32>} : memref<8x128xf32, #tpu.memory_space<vmem>>, vector<8x128xf32>,
    } else {
    }
    return
  }
  func.func @transform_0(%arg0: i32, %arg1: i32, %arg2: i32) -> (i32, i32) {
    %c0_i32 = arith.constant 0 : i32
    return %arg0, %arg2 : i32, i32
  }
  func.func @transform_1(%arg0: i32, %arg1: i32, %arg2: i32) -> (i32, i32) {
    %c0_i32 = arith.constant 0 : i32
    return %arg2, %arg1 : i32, i32
  }
  func.func @transform_2(%arg0: i32, %arg1: i32, %arg2: i32) -> (i32, i32) {
    %c0_i32 = arith.constant 0 : i32
    %c0_i32_0 = arith.constant 0 : i32
    return %c0_i32, %arg1 : i32, i32
  }
  func.func @transform_3(%arg0: i32, %arg1: i32, %arg2: i32) -> (i32, i32) {
    %c0_i32 = arith.constant 0 : i32
    return %arg0, %arg1 : i32, i32
  }
}

</mosaic_0001>

<llo_original>
// kernel: tpu_custom_call.1
$region0: #{tpu_custom_call.1}
  #allocation0 [shape = 'u32[]', space=smem, size = 0x4, offset = 0x4, fixed_abs, tag = 'smem constant byte address 0x4 - core index']
  #allocation1 [shape = 'u32[144,128]{1,0:T(1,128)}', space=vmem, size = 0x12000, scoped, tag = 'internal scratch']
  #allocation2 [shape = 'f32[8,128]{1,0:T(8,128)}', space=vmem, size = 0x1000, scoped, tag = 'scratch operand']
  %s0 = inlined_call_operand.hbm [shape: f32[8,128], index: 0, kind: input, shape index: {}]
  %s1 = inlined_call_operand.hbm [shape: f32[128,128], index: 1, kind: input, shape index: {}]
  %s2 = inlined_call_operand.hbm [shape: f32[1,128], index: 2, kind: input, shape index: {}]
  %s3 = inlined_call_operand.hbm [shape: f32[8,128], index: 3, kind: output, shape index: {}]
  %s4 = sld [smem:[#allocation0]]
  $region46: #{tpu_custom_call.1} parent=0
    _
  %s6 = ssub.s32 1, %s4
  %s7 = scalar_select 0, %s6, %s4
  $region1: #{tpu_custom_call.1} parent=0
    #allocation3 [shape = 'u8[4096]{0}', space=vmem, size = 0x1000, scoped, tag = 'input window, operand 0, single buffered']
    #allocation4 [shape = 's32[1]{0}', space=sflag, size = 0x4, scoped, tag = 'scoped memory for tpu_custom_call.1']
    #allocation5 [shape = 's32[1]{0}', space=sflag, size = 0x4, scoped, tag = 'scoped memory for tpu_custom_call.1']
    #allocation6 [shape = 'u8[65536]{0}', space=vmem, size = 0x10000, scoped, tag = 'input window, operand 1, single buffered']
    #allocation7 [shape = 's32[1]{0}', space=sflag, size = 0x4, scoped, tag = 'scoped memory for tpu_custom_call.1']
    #allocation8 [shape = 'u8[512]{0}', space=vmem, size = 0x400, scoped, tag = 'input window, operand 2, single buffered']
    #allocation9 [shape = 'u8[4096]{0}', space=vmem, size = 0x1000, scoped, tag = 'output window, operand 0, single buffered']
    %8 = vsyncpa [#allocation4], 0
    %9 = vsyncpa [#allocation7], 0
    %10 = vsyncpa [#allocation5], 0
    // Predicated region
    $region2: #{tpu_custom_call.1} parent=1 // pred_check
      _
    $region3: #{tpu_custom_call.1} parent=1 // pred_check_branch
      %12 = sbr.rel (0) target = $region5
    $region4: #{tpu_custom_call.1} parent=1 // pred_region
      %s14 = ssub.s32 128, 128
      %15 = vsyncadd [#allocation4], %s14
      %s17 = sshll.u32 [#allocation3], 4
      %s18 = int_to_ptr.vmem [resolvable:$true] %s17
      %20 = dma.hbm_to_vmem [thread:$0]  %s0, 128, %s18, [#allocation4]
    $region5: #{tpu_custom_call.1} parent=1 // pred_fallthru
      _
    // Predicated region
    $region6: #{tpu_custom_call.1} parent=1 // pred_check
      _
    $region7: #{tpu_custom_call.1} parent=1 // pred_check_branch
      %22 = sbr.rel (0) target = $region9
    $region8: #{tpu_custom_call.1} parent=1 // pred_region
      %s24 = ssub.s32 2048, 2048
      %25 = vsyncadd [#allocation7], %s24
      %s26 = sshll.u32 [#allocation6], 4
      %s27 = int_to_ptr.vmem [resolvable:$true] %s26
      %32 = dma.hbm_to_vmem [thread:$0]  %s1, 2048, %s27, [#allocation7], 128, 128, 8
    $region9: #{tpu_custom_call.1} parent=1 // pred_fallthru
      _
    // Predicated region
    $region10: #{tpu_custom_call.1} parent=1 // pred_check
      _
    $region11: #{tpu_custom_call.1} parent=1 // pred_check_branch
      %34 = sbr.rel (0) target = $region13
    $region12: #{tpu_custom_call.1} parent=1 // pred_region
      %s36 = ssub.s32 16, 16
      %37 = vsyncadd [#allocation7], %s36
      %s39 = sshll.u32 [#allocation8], 4
      %s40 = int_to_ptr.vmem [resolvable:$true] %s39
      %42 = dma.hbm_to_vmem [thread:$0]  %s2, 16, %s40, [#allocation7]
    $region13: #{tpu_custom_call.1} parent=1 // pred_fallthru
      _
    // Predicated region
    $region14: #{tpu_custom_call.1} parent=1 // pred_check
      _
    $region15: #{tpu_custom_call.1} parent=1 // pred_check_branch
      %44 = sbr.rel (0) target = $region17
    $region16: #{tpu_custom_call.1} parent=1 // pred_region
      %45 = dma.done [#allocation4], 128
    $region17: #{tpu_custom_call.1} parent=1 // pred_fallthru
      _
    // Predicated region
    $region18: #{tpu_custom_call.1} parent=1 // pred_check
      _
    $region19: #{tpu_custom_call.1} parent=1 // pred_check_branch
      %47 = sbr.rel (0) target = $region21
    $region20: #{tpu_custom_call.1} parent=1 // pred_region
      %48 = dma.done [#allocation7], 2048
    $region21: #{tpu_custom_call.1} parent=1 // pred_fallthru
      _
    // Predicated region
    $region22: #{tpu_custom_call.1} parent=1 // pred_check
      _
    $region23: #{tpu_custom_call.1} parent=1 // pred_check_branch
      %50 = sbr.rel (0) target = $region25
    $region24: #{tpu_custom_call.1} parent=1 // pred_region
      %51 = dma.done [#allocation7], 16
    $region25: #{tpu_custom_call.1} parent=1 // pred_fallthru
      _
    %v52 = vld [vmem:[#allocation3] sm:$0xff]
    %v53 = vld [vmem:[#allocation6] sm:$0xff]
    %v54 = vld [vmem:[#allocation6 + $0x8] sm:$0xff]
    %v55 = vld [vmem:[#allocation6 + $0x10] sm:$0xff]
    %v56 = vld [vmem:[#allocation6 + $0x18] sm:$0xff]
    %v57 = vld [vmem:[#allocation6 + $0x20] sm:$0xff]
    %v58 = vld [vmem:[#allocation6 + $0x28] sm:$0xff]
    %v59 = vld [vmem:[#allocation6 + $0x30] sm:$0xff]
    %v60 = vld [vmem:[#allocation6 + $0x38] sm:$0xff]
    %v61 = vld [vmem:[#allocation6 + $0x40] sm:$0xff]
    %v62 = vld [vmem:[#allocation6 + $0x48] sm:$0xff]
    %v63 = vld [vmem:[#allocation6 + $0x50] sm:$0xff]
    %v64 = vld [vmem:[#allocation6 + $0x58] sm:$0xff]
    %v65 = vld [vmem:[#allocation6 + $0x60] sm:$0xff]
    %v66 = vld [vmem:[#allocation6 + $0x68] sm:$0xff]
    %v67 = vld [vmem:[#allocation6 + $0x70] sm:$0xff]
    %v68 = vld [vmem:[#allocation6 + $0x78] sm:$0xff]
    %69 = vmatprep.subr.mxu0 0.0
    %70 = vmatpush1.msra.mxu0 %v53
    %71 = vmatprep.subr.mxu0 0.0
    %72 = vmatpush1.msra.mxu0 %v54
    %73 = vmatprep.subr.mxu0 0.0
    %74 = vmatpush1.msra.mxu0 %v55
    %75 = vmatprep.subr.mxu0 0.0
    %76 = vmatpush1.msra.mxu0 %v56
    %77 = vmatprep.subr.mxu0 0.0
    %78 = vmatpush1.msra.mxu0 %v57
    %79 = vmatprep.subr.mxu0 0.0
    %80 = vmatpush1.msra.mxu0 %v58
    %81 = vmatprep.subr.mxu0 0.0
    %82 = vmatpush1.msra.mxu0 %v59
    %83 = vmatprep.subr.mxu0 0.0
    %84 = vmatpush1.msra.mxu0 %v60
    %85 = vmatprep.subr.mxu0 0.0
    %86 = vmatpush1.msra.mxu0 %v61
    %87 = vmatprep.subr.mxu0 0.0
    %88 = vmatpush1.msra.mxu0 %v62
    %89 = vmatprep.subr.mxu0 0.0
    %90 = vmatpush1.msra.mxu0 %v63
    %91 = vmatprep.subr.mxu0 0.0
    %92 = vmatpush1.msra.mxu0 %v64
    %93 = vmatprep.subr.mxu0 0.0
    %94 = vmatpush1.msra.mxu0 %v65
    %95 = vmatprep.subr.mxu0 0.0
    %96 = vmatpush1.msra.mxu0 %v66
    %97 = vmatprep.subr.mxu0 0.0
    %98 = vmatpush1.msra.mxu0 %v67
    %99 = vmatprep.subr.mxu0 0.0
    %100 = vmatpush1.msra.mxu0 %v68
    %101 = vmatprep.subr.mxu0 0.0
    %102 = vmatpush1.msra.mxu0 0.0
    %103 = vmatprep.subr.mxu0 0.0
    %104 = vmatpush1.msra.mxu0 0.0
    %105 = vmatprep.subr.mxu0 0.0
    %106 = vmatpush1.msra.mxu0 0.0
    %107 = vmatprep.subr.mxu0 0.0
    %108 = vmatpush1.msra.mxu0 0.0
    %109 = vmatprep.subr.mxu0 0.0
    %110 = vmatpush1.msra.mxu0 0.0
    %111 = vmatprep.subr.mxu0 0.0
    %112 = vmatpush1.msra.mxu0 0.0
    %113 = vmatprep.subr.mxu0 0.0
    %114 = vmatpush1.msra.mxu0 0.0
    %115 = vmatprep.subr.mxu0 0.0
    %116 = vmatpush1.msra.mxu0 0.0
    %117 = vmatprep.subr.mxu0 0.0
    %118 = vmatpush1.msra.mxu0 0.0
    %119 = vmatprep.subr.mxu0 0.0
    %120 = vmatpush1.msra.mxu0 0.0
    %121 = vmatprep.subr.mxu0 0.0
    %122 = vmatpush1.msra.mxu0 0.0
    %123 = vmatprep.subr.mxu0 0.0
    %124 = vmatpush1.msra.mxu0 0.0
    %125 = vmatprep.subr.mxu0 0.0
    %126 = vmatpush1.msra.mxu0 0.0
    %127 = vmatprep.subr.mxu0 0.0
    %128 = vmatpush1.msra.mxu0 0.0
    %129 = vmatprep.subr.mxu0 0.0
    %130 = vmatpush1.msra.mxu0 0.0
    %131 = vmatprep.subr.mxu0 0.0
    %132 = vmatpush1.msra.mxu0 0.0
    %133 = vmatprep.mubr.f32.mxu0 0.0
    %134 = vmatmul.mubr.f32.gmra.mrb[0].mxu0 %v52
    %v135 = vpop.f32.mrb[0].mxu0
    %v136 = vadd.f32 0.0, %v135
    %v137 = vpop.f32.mrb[0].mxu0
    %138 = vdwg.mxu0
    %p139 = scmp.eq.s32.totalorder 0, 0
    // Predicated region
    $region26: #{tpu_custom_call.1} parent=1 // pred_check
      %p140 = pneg %p139
    $region27: #{tpu_custom_call.1} parent=1 // pred_check_branch
      %142 = sbr.rel (%p140) target = $region29
    $region28: #{tpu_custom_call.1} parent=1 // pred_region
      %143 = vst [vmem:[#allocation2] sm:$0xff] %v136
    $region29: #{tpu_custom_call.1} parent=1 // pred_fallthru
      _
    %p144 = scmp.gt.s32.totalorder 0, 0
    // Predicated region
    $region30: #{tpu_custom_call.1} parent=1 // pred_check
      %p145 = pneg %p144
    $region31: #{tpu_custom_call.1} parent=1 // pred_check_branch
      %147 = sbr.rel (%p145) target = $region33
    $region32: #{tpu_custom_call.1} parent=1 // pred_region
      %v148 = vld [vmem:[#allocation2] sm:$0xff]
      %v149 = vadd.f32 %v148, %v136
      %150 = vst [vmem:[#allocation2] sm:$0xff] %v149
    $region33: #{tpu_custom_call.1} parent=1 // pred_fallthru
      _
    // Predicated region
    $region34: #{tpu_custom_call.1} parent=1 // pred_check
      %p151 = pneg %p139
    $region35: #{tpu_custom_call.1} parent=1 // pred_check_branch
      %153 = sbr.rel (%p151) target = $region37
    $region36: #{tpu_custom_call.1} parent=1 // pred_region
      %v154 = vld [vmem:[#allocation2] sm:$0xff]
      %v155 = vld [vmem:[#allocation8] sm:$0x1]
      %v157 = vlaneseq
      %v158 = vshrl.u32 %v157, 7
      %v159 = vsub.s32 0, %v158
      %v160 = vrot.slane %v155, %v159
      %v162 = vadd.f32 %v154, %v160
      %v163 = vmax.f32 %v162, 0.0
      %164 = vst [vmem:[#allocation9] sm:$0xff] %v163
    $region37: #{tpu_custom_call.1} parent=1 // pred_fallthru
      _
    // Predicated region
    $region38: #{tpu_custom_call.1} parent=1 // pred_check
      _
    $region39: #{tpu_custom_call.1} parent=1 // pred_check_branch
      %166 = sbr.rel (0) target = $region41
    $region40: #{tpu_custom_call.1} parent=1 // pred_region
      %s168 = ssub.s32 128, 128
      %169 = vsyncadd [#allocation5], %s168
      %s171 = sshll.u32 [#allocation9], 4
      %s172 = int_to_ptr.vmem [resolvable:$true] %s171
      %174 = dma.vmem_to_hbm [thread:$0]  %s172, 128, %s3, [#allocation5]
    $region41: #{tpu_custom_call.1} parent=1 // pred_fallthru
      _
    // Predicated region
    $region42: #{tpu_custom_call.1} parent=1 // pred_check
      _
    $region43: #{tpu_custom_call.1} parent=1 // pred_check_branch
      %176 = sbr.rel (0) target = $region45
    $region44: #{tpu_custom_call.1} parent=1 // pred_region
      %177 = dma.done [#allocation5], 128
    $region45: #{tpu_custom_call.1} parent=1 // pred_fallthru
      _
    %178 = vsyncpa [#allocation4], 1
    %179 = vsyncpa [#allocation7], 1
    %180 = vsyncpa [#allocation5], 1

</llo_original>
